<compile_context>
chip_gen: v7x
topology: tpu7x:2x2x1
jax: 0.10.0
libtpu: 0.0.40
codegen_flags: <defaults>
</compile_context>

<pallas_src>
import functools

import jax
import jax.numpy as jnp
from jax.experimental import pallas as pl
from jax.experimental.pallas import tpu as pltpu

_LANE = 128
_SUBLANE = 8
_POOL_STRIP = 512  # lanes reduced per accumulation step inside the kernels


def _round_up(n, m):
    return ((n + m - 1) // m) * m


def _vmem_limit_bytes():
    """Explicit scoped-VMEM limit: ~3/4 of physical, never above 64 MiB."""
    try:
        phys = int(pltpu.get_tpu_info().vmem_capacity_bytes)
    except Exception:
        phys = 64 * 1024 * 1024  # conservative: v7x physical VMEM per core
    return min((phys * 3) // 4, 64 * 1024 * 1024)


def _min_parallel_steps():
    """v7x-class chips run 2 TensorCores per device that split 'parallel' grid
    axes; ask for >=4 steps there. Single-TC chips take the biggest block."""
    try:
        kind = jax.devices()[0].device_kind.lower()
    except Exception:
        return 1
    return 4 if "7" in kind else 1


def _choose_batch_tile(B, per_elem_bytes, block_budget, min_steps):
    bt = max(1, min(B, block_budget // max(per_elem_bytes, 1)))
    if min_steps > 1:
        bt = min(bt, max(1, pl.cdiv(B, min_steps)))
    return bt


def _pooled_sum_f32(x_ref):
    """Sum a (bt, C, HW) ref over the lane axis with f32 accumulation,
    strip-wise so live values stay within a few vregs (no full-tile f32
    temporary for bf16/f32 inputs)."""
    bt, c, hw_blk = x_ref.shape
    acc = jnp.zeros((bt, c), jnp.float32)
    for s in range(0, hw_blk, _POOL_STRIP):
        e = min(s + _POOL_STRIP, hw_blk)
        acc = acc + jnp.sum(x_ref[:, :, s:e], axis=-1, dtype=jnp.float32)
    return acc


# ---------------------------------------------------------------------------
# Fused single-pass kernel: pool -> fc1 -> relu -> fc2 -> sigmoid -> rescale
# ---------------------------------------------------------------------------
def _se_fused_kernel(inv_hw, x_ref, w1t_ref, w2t_ref, o_ref):
    # x_ref / o_ref: (bt, C, HW); w1t_ref: (C, Hp); w2t_ref: (Hp, C)
    pooled = _pooled_sum_f32(x_ref) * inv_hw                       # (bt, C) f32
    y1 = jnp.maximum(
        jnp.dot(pooled, w1t_ref[...], preferred_element_type=jnp.float32), 0.0)
    z = jnp.dot(y1, w2t_ref[...], preferred_element_type=jnp.float32)
    gate = (1.0 / (1.0 + jnp.exp(-z))).astype(o_ref.dtype)        # (bt, C)
    # Re-scale: streaming pass in the input dtype; ref re-read at point of use.
    o_ref[...] = x_ref[...] * gate[:, :, None]


# ---------------------------------------------------------------------------
# Two-pass HW-tiled path (large C*HW): pass 1 computes the per-(b, c) gate,
# pass 2 streams HW tiles for the rescale.
# ---------------------------------------------------------------------------
def _se_gate_kernel(hw, hw_tile, x_ref, w1t_ref, w2t_ref, gate_ref, sum_sc):
    # x_ref: (1, C, hw_tile); gate_ref: (1, C, 1); sum_sc: (1, C) f32 scratch.
    h = pl.program_id(1)

    @pl.when(h == 0)
    def _():
        sum_sc[...] = jnp.zeros_like(sum_sc)

    base = h * hw_tile
    acc = jnp.zeros(sum_sc.shape, jnp.float32)
    for s in range(0, hw_tile, _POOL_STRIP):
        e = min(s + _POOL_STRIP, hw_tile)
        v = x_ref[:, :, s:e]
        # Mask lanes past the true spatial extent (ragged last HW tile).
        lane = jax.lax.broadcasted_iota(jnp.int32, v.shape, 2) + (base + s)
        v = jnp.where(lane < hw, v, jnp.zeros_like(v))
        acc = acc + jnp.sum(v, axis=-1, dtype=jnp.float32)
    sum_sc[...] += acc

    @pl.when(h == pl.num_programs(1) - 1)
    def _():
        pooled = sum_sc[...] * (1.0 / hw)
        y1 = jnp.maximum(
            jnp.dot(pooled, w1t_ref[...], preferred_element_type=jnp.float32),
            0.0)
        z = jnp.dot(y1, w2t_ref[...], preferred_element_type=jnp.float32)
        gate_ref[...] = (1.0 / (1.0 + jnp.exp(-z))).astype(
            gate_ref.dtype)[:, :, None]


def _se_scale_kernel(x_ref, gate_ref, o_ref):
    # x_ref / o_ref: (1, C, hw_tile); gate_ref: (1, C, 1)
    o_ref[...] = x_ref[...] * gate_ref[...]


# ---------------------------------------------------------------------------
# Wrapper
# ---------------------------------------------------------------------------
def se_block(x, w1, w2, *, block_budget=None):
    """SEBlock forward. x: (B, C, H, W); w1: (C//r, C); w2: (C, C//r)."""
    B, C, H, W = x.shape
    hidden = w1.shape[0]
    HW = H * W
    xf = x.reshape(B, C, HW)
    itemsize = x.dtype.itemsize

    # Zero-pad the tiny hidden dim to a full 128-lane tile (zeros are inert:
    # extra fc1 columns are relu(0)=0 and they multiply zero rows of w2t).
    Hp = _round_up(max(hidden, _LANE), _LANE)
    w1t = jnp.zeros((C, Hp), w1.dtype).at[:, :hidden].set(w1.T)
    w2t = jnp.zeros((Hp, C), w2.dtype).at[:hidden, :].set(w2.T)

    # VMEM-aware block budget: the pipeline double-buffers the input and the
    # output block, so resident VMEM ~= 4 * block_bytes + weights + scratch.
    vmem_limit = _vmem_limit_bytes()
    if block_budget is None:
        block_budget = vmem_limit // 4 - 2 * 1024 * 1024

    c_pad = _round_up(C, _SUBLANE)
    hw_pad = _round_up(HW, _LANE)
    per_elem_bytes = c_pad * hw_pad * itemsize

    if per_elem_bytes <= block_budget:
        # ---- Fused single-pass path: one (bt, C, HW) block per grid step ----
        bt = _choose_batch_tile(B, per_elem_bytes, block_budget,
                                _min_parallel_steps())
        grid = (pl.cdiv(B, bt),)
        out = pl.pallas_call(
            functools.partial(_se_fused_kernel, float(1.0 / HW)),
            out_shape=jax.ShapeDtypeStruct((B, C, HW), x.dtype),
            grid_spec=pltpu.PrefetchScalarGridSpec(
                num_scalar_prefetch=0,
                grid=grid,
                in_specs=[
                    pl.BlockSpec((bt, C, HW), lambda b: (b, 0, 0)),
                    pl.BlockSpec((C, Hp), lambda b: (0, 0)),
                    pl.BlockSpec((Hp, C), lambda b: (0, 0)),
                ],
                out_specs=pl.BlockSpec((bt, C, HW), lambda b: (b, 0, 0)),
            ),
            compiler_params=pltpu.CompilerParams(
                dimension_semantics=("parallel",),
                vmem_limit_bytes=vmem_limit,
            ),
        )(xf, w1t, w2t)
        return out.reshape(B, C, H, W)

    # ---- Two-pass HW-tiled path: a single batch element's block is too big --
    lanes_budget = block_budget // max(1, c_pad * itemsize)
    hw_tile = min(hw_pad, max(_LANE, (lanes_budget // _LANE) * _LANE))
    nhw = pl.cdiv(HW, hw_tile)

    # Pass 1: f32 mean accumulator over HW tiles; gate computed at last step.
    gate = pl.pallas_call(
        functools.partial(_se_gate_kernel, HW, hw_tile),
        out_shape=jax.ShapeDtypeStruct((B, C, 1), x.dtype),
        grid_spec=pltpu.PrefetchScalarGridSpec(
            num_scalar_prefetch=0,
            grid=(B, nhw),
            in_specs=[
                pl.BlockSpec((1, C, hw_tile), lambda b, h: (b, 0, h)),
                pl.BlockSpec((C, Hp), lambda b, h: (0, 0)),
                pl.BlockSpec((Hp, C), lambda b, h: (0, 0)),
            ],
            out_specs=pl.BlockSpec((1, C, 1), lambda b, h: (b, 0, 0)),
            scratch_shapes=[pltpu.VMEM((1, C), jnp.float32)],
        ),
        compiler_params=pltpu.CompilerParams(
            dimension_semantics=("parallel", "arbitrary"),
            vmem_limit_bytes=vmem_limit,
        ),
    )(xf, w1t, w2t)

    # Pass 2: stream HW tiles and rescale by the per-channel gate.
    out = pl.pallas_call(
        _se_scale_kernel,
        out_shape=jax.ShapeDtypeStruct((B, C, HW), x.dtype),
        grid_spec=pltpu.PrefetchScalarGridSpec(
            num_scalar_prefetch=0,
            grid=(B, nhw),
            in_specs=[
                pl.BlockSpec((1, C, hw_tile), lambda b, h: (b, 0, h)),
                pl.BlockSpec((1, C, 1), lambda b, h: (b, 0, 0)),
            ],
            out_specs=pl.BlockSpec((1, C, hw_tile), lambda b, h: (b, 0, h)),
        ),
        compiler_params=pltpu.CompilerParams(
            dimension_semantics=("parallel", "parallel"),
            vmem_limit_bytes=vmem_limit,
        ),
    )(xf, gate)
    return out.reshape(B, C, H, W)


def se_block_ref(x, w1, w2):
    # Pure-JAX reference matching the PyTorch module exactly.
    y = jnp.mean(x, axis=(2, 3))                 # AdaptiveAvgPool2d(1) + view
    y = jnp.maximum(y @ w1.T, 0.0)               # fc1 + ReLU
    y = jax.nn.sigmoid(y @ w2.T)                 # fc2 + Sigmoid
    return x * y[:, :, None, None]


def _make_inputs(key, B, C, H, W, reduction=16):
    # SEBlock(in_channels=C, reduction=16): fc1/fc2 are bias-free Linears.
    hidden = max(1, C // reduction)
    kx, k1, k2 = jax.random.split(key, 3)
    x = jax.random.normal(kx, (B, C, H, W), dtype=jnp.float32)
    w1 = jax.random.normal(k1, (hidden, C), dtype=jnp.float32) * (1.0 / C ** 0.5)
    w2 = jax.random.normal(k2, (C, hidden), dtype=jnp.float32) * (1.0 / hidden ** 0.5)
    return x, w1, w2


if __name__ == "__main__":
    key = jax.random.PRNGKey(0)
    cases = [
        # (shape (B, C, H, W), block_budget override)
        ((2, 32, 16, 16), None),        # fused path, lane-dense HW=256
        ((2, 32, 7, 7), None),          # fused path, HW=49 (full-extent block)
        ((3, 32, 16, 16), 70 * 1024),   # fused path, ragged last batch block
        ((2, 32, 16, 16), 16 * 1024),   # two-pass path, HW tiled in 128 lanes
        ((2, 32, 7, 7), 4 * 1024),      # two-pass path, masked ragged HW tile
    ]
    for i, ((B, C, H, W), budget) in enumerate(cases):
        x, w1, w2 = _make_inputs(jax.random.fold_in(key, i), B, C, H, W)
        out = jax.block_until_ready(se_block(x, w1, w2, block_budget=budget))
        ref = se_block_ref(x, w1, w2)
        assert out.shape == ref.shape
        assert jnp.allclose(out, ref, atol=2e-5, rtol=1e-5), (
            f"mismatch vs reference for case {i}: shape {(B, C, H, W)}")
    print("KERNEL_OK")
</pallas_src>

<mosaic_0001>
module attributes {stable_mosaic.version = 11 : i64} {
  func.func @_se_fused_kernel(%arg0: i32, %arg1: memref<2x32x256xf32, #tpu.memory_space<vmem>>, %arg2: memref<32x128xf32, #tpu.memory_space<vmem>>, %arg3: memref<128x32xf32, #tpu.memory_space<vmem>>, %arg4: memref<2x32x256xf32, #tpu.memory_space<vmem>>) attributes {dimension_semantics = [#tpu.dimension_semantics<parallel>], iteration_bounds = array<i64: 1>, scalar_prefetch = 0 : i64, scratch_operands = 0 : i64, tpu.core_type = #tpu.core_type<tc>, window_params = [{transform_indices = @transform_0, window_bounds = array<i64: 2, 32, 256>}, {pipeline_mode = #tpu.pipeline_mode<synchronous>, transform_indices = @transform_1, window_bounds = array<i64: 32, 128>}, {pipeline_mode = #tpu.pipeline_mode<synchronous>, transform_indices = @transform_2, window_bounds = array<i64: 128, 32>}, {transform_indices = @transform_3, window_bounds = array<i64: 2, 32, 256>}]} {
    %cst = arith.constant 0.000000e+00 : f32
    %0 = vector.broadcast %cst : f32 to vector<2x32xf32>
    %c0 = arith.constant 0 : index
    %c0_0 = arith.constant 0 : index
    %c0_1 = arith.constant 0 : index
    %1 = vector.load %arg1[%c0, %c0_0, %c0_1] : memref<2x32x256xf32, #tpu.memory_space<vmem>>, vector<2x32x256xf32>
    %cst_2 = arith.constant dense<0.000000e+00> : vector<2x32xf32>
    %2 = vector.multi_reduction <add>, %1, %cst_2 [2] : vector<2x32x256xf32> to vector<2x32xf32>
    %3 = arith.addf %0, %2 : vector<2x32xf32>
    %cst_3 = arith.constant 3.906250e-03 : f32
    %4 = vector.broadcast %cst_3 : f32 to vector<2x32xf32>
    %5 = arith.mulf %3, %4 : vector<2x32xf32>
    %c0_4 = arith.constant 0 : index
    %c0_5 = arith.constant 0 : index
    %6 = vector.load %arg2[%c0_4, %c0_5] : memref<32x128xf32, #tpu.memory_space<vmem>>, vector<32x128xf32>
    %cst_6 = arith.constant dense<0.000000e+00> : vector<2x128xf32>
    %7 = tpu.matmul %5, %6, %cst_6 {dimension_numbers = #tpu.dot_dimension_numbers<[1], [0], [0], [1], [0, 0, 1, 1], [], []>} : vector<2x32xf32>, vector<32x128xf32>, vector<2x128xf32> -> vector<2x128xf32>
    %cst_7 = arith.constant 0.000000e+00 : f32
    %8 = vector.broadcast %cst_7 : f32 to vector<2x128xf32>
    %9 = arith.maximumf %7, %8 : vector<2x128xf32>
    %c0_8 = arith.constant 0 : index
    %c0_9 = arith.constant 0 : index
    %10 = vector.load %arg3[%c0_8, %c0_9] : memref<128x32xf32, #tpu.memory_space<vmem>>, vector<128x32xf32>
    %cst_10 = arith.constant dense<0.000000e+00> : vector<2x32xf32>
    %11 = tpu.matmul %9, %10, %cst_10 {dimension_numbers = #tpu.dot_dimension_numbers<[1], [0], [0], [1], [0, 0, 1, 1], [], []>} : vector<2x128xf32>, vector<128x32xf32>, vector<2x32xf32> -> vector<2x32xf32>
    %cst_11 = arith.constant 0.000000e+00 : f32
    %12 = vector.broadcast %cst_11 : f32 to vector<2x32xf32>
    %13 = arith.subf %12, %11 : vector<2x32xf32>
    %14 = math.exp %13 : vector<2x32xf32>
    %cst_12 = arith.constant 1.000000e+00 : f32
    %15 = vector.broadcast %cst_12 : f32 to vector<2x32xf32>
    %16 = arith.addf %15, %14 : vector<2x32xf32>
    %cst_13 = arith.constant 1.000000e+00 : f32
    %17 = vector.broadcast %cst_13 : f32 to vector<2x32xf32>
    %18 = arith.divf %17, %16 : vector<2x32xf32>
    %c0_14 = arith.constant 0 : index
    %c0_15 = arith.constant 0 : index
    %c0_16 = arith.constant 0 : index
    %19 = vector.load %arg1[%c0_14, %c0_15, %c0_16] : memref<2x32x256xf32, #tpu.memory_space<vmem>>, vector<2x32x256xf32>
    %20 = vector.shape_cast %18 : vector<2x32xf32> to vector<2x32x1xf32>
    %21 = vector.broadcast %20 : vector<2x32x1xf32> to vector<2x32x256xf32>
    %22 = arith.mulf %19, %21 : vector<2x32x256xf32>
    %c0_17 = arith.constant 0 : index
    %c0_18 = arith.constant 0 : index
    %c0_19 = arith.constant 0 : index
    %23 = vector.load %arg4[%c0_17, %c0_18, %c0_19] : memref<2x32x256xf32, #tpu.memory_space<vmem>>, vector<2x32x256xf32>
    tpu.vector_store %arg4[%c0_17, %c0_18, %c0_19], %22 {strides = array<i32>} : memref<2x32x256xf32, #tpu.memory_space<vmem>>, vector<2x32x256xf32>,
    return
  }
  func.func @transform_0(%arg0: i32) -> (i32, i32, i32) {
    %c0_i32 = arith.constant 0 : i32
    %c0_i32_0 = arith.constant 0 : i32
    %c0_i32_1 = arith.constant 0 : i32
    return %arg0, %c0_i32, %c0_i32_0 : i32, i32, i32
  }
  func.func @transform_1(%arg0: i32) -> (i32, i32) {
    %c0_i32 = arith.constant 0 : i32
    %c0_i32_0 = arith.constant 0 : i32
    %c0_i32_1 = arith.constant 0 : i32
    return %c0_i32, %c0_i32_0 : i32, i32
  }
  func.func @transform_2(%arg0: i32) -> (i32, i32) {
    %c0_i32 = arith.constant 0 : i32
    %c0_i32_0 = arith.constant 0 : i32
    %c0_i32_1 = arith.constant 0 : i32
    return %c0_i32, %c0_i32_0 : i32, i32
  }
  func.func @transform_3(%arg0: i32) -> (i32, i32, i32) {
    %c0_i32 = arith.constant 0 : i32
    %c0_i32_0 = arith.constant 0 : i32
    %c0_i32_1 = arith.constant 0 : i32
    return %arg0, %c0_i32, %c0_i32_0 : i32, i32, i32
  }
}

</mosaic_0001>

<llo_original>
// kernel: tpu_custom_call.1
$region0: #{tpu_custom_call.1}
  #allocation0 [shape = 'u32[]', space=smem, size = 0x4, offset = 0x4, fixed_abs, tag = 'smem constant byte address 0x4 - core index']
  #allocation1 [shape = 'u32[144,128]{1,0:T(1,128)}', space=vmem, size = 0x12000, scoped, tag = 'internal scratch']
  %s0 = inlined_call_operand.vmem [shape: f32[2,32,256], index: 0, kind: input, shape index: {}]
  %s1 = inlined_call_operand.vmem [shape: f32[32,128], index: 1, kind: input, shape index: {}]
  %s2 = inlined_call_operand.vmem [shape: f32[128,32], index: 2, kind: input, shape index: {}]
  %s3 = inlined_call_operand.hbm [shape: f32[2,32,256], index: 3, kind: output, shape index: {}]
  %s4 = sld [smem:[#allocation0]]
  $region22: #{tpu_custom_call.1} parent=0
    _
  %s6 = ssub.s32 1, %s4
  %s7 = scalar_select 0, %s6, %s4
  $region1: #{tpu_custom_call.1} parent=0
    #allocation2 [shape = 'u8[65536]{0}', space=vmem, size = 0x10000, scoped, tag = 'output window, operand 0, single buffered']
    #allocation3 [shape = 's32[1]{0}', space=sflag, size = 0x4, scoped, tag = 'scoped memory for tpu_custom_call.1']
    %8 = vsyncpa [#allocation3], 0
    // Predicated region
    $region2: #{tpu_custom_call.1} parent=1 // pred_check
      _
    $region3: #{tpu_custom_call.1} parent=1 // pred_check_branch
      %10 = sbr.rel (0) target = $region5
    $region4: #{tpu_custom_call.1} parent=1 // pred_region
      _
    $region5: #{tpu_custom_call.1} parent=1 // pred_fallthru
      _
    // Predicated region
    $region6: #{tpu_custom_call.1} parent=1 // pred_check
      _
    $region7: #{tpu_custom_call.1} parent=1 // pred_check_branch
      %12 = sbr.rel (0) target = $region9
    $region8: #{tpu_custom_call.1} parent=1 // pred_region
      _
    $region9: #{tpu_custom_call.1} parent=1 // pred_fallthru
      _
    // Predicated region
    $region10: #{tpu_custom_call.1} parent=1 // pred_check
      _
    $region11: #{tpu_custom_call.1} parent=1 // pred_check_branch
      %14 = sbr.rel (0) target = $region13
    $region12: #{tpu_custom_call.1} parent=1 // pred_region
      _
    $region13: #{tpu_custom_call.1} parent=1 // pred_fallthru
      _
    %v15 = vld [vmem:[%s0] sm:$0xff]
    %v16 = vld [vmem:[%s0 + $0x8] sm:$0xff]
    %v17 = vld [vmem:[%s0 + $0x10] sm:$0xff]
    %v18 = vld [vmem:[%s0 + $0x18] sm:$0xff]
    %v19 = vld [vmem:[%s0 + $0x20] sm:$0xff]
    %v20 = vld [vmem:[%s0 + $0x28] sm:$0xff]
    %v21 = vld [vmem:[%s0 + $0x30] sm:$0xff]
    %v22 = vld [vmem:[%s0 + $0x38] sm:$0xff]
    %v23 = vld [vmem:[%s0 + $0x40] sm:$0xff]
    %v24 = vld [vmem:[%s0 + $0x48] sm:$0xff]
    %v25 = vld [vmem:[%s0 + $0x50] sm:$0xff]
    %v26 = vld [vmem:[%s0 + $0x58] sm:$0xff]
    %v27 = vld [vmem:[%s0 + $0x60] sm:$0xff]
    %v28 = vld [vmem:[%s0 + $0x68] sm:$0xff]
    %v29 = vld [vmem:[%s0 + $0x70] sm:$0xff]
    %v30 = vld [vmem:[%s0 + $0x78] sm:$0xff]
    %v31 = vadd.f32 %v15, %v16
    %32 = vadd.xlane.f32.xlu0 %v31
    %v33 = vpop.xlane.xlu0 %32
    %v34 = vadd.f32 %v17, %v18
    %35 = vadd.xlane.f32.xlu0 %v34
    %v36 = vpop.xlane.xlu0 %35
    %v37 = vadd.f32 %v19, %v20
    %38 = vadd.xlane.f32.xlu0 %v37
    %v39 = vpop.xlane.xlu0 %38
    %v40 = vadd.f32 %v21, %v22
    %41 = vadd.xlane.f32.xlu0 %v40
    %v42 = vpop.xlane.xlu0 %41
    %v43 = vadd.f32 %v23, %v24
    %44 = vadd.xlane.f32.xlu0 %v43
    %v45 = vpop.xlane.xlu0 %44
    %v46 = vadd.f32 %v25, %v26
    %47 = vadd.xlane.f32.xlu0 %v46
    %v48 = vpop.xlane.xlu0 %47
    %v49 = vadd.f32 %v27, %v28
    %50 = vadd.xlane.f32.xlu0 %v49
    %v51 = vpop.xlane.xlu0 %50
    %v52 = vadd.f32 %v29, %v30
    %53 = vadd.xlane.f32.xlu0 %v52
    %v54 = vpop.xlane.xlu0 %53
    %v55 = vadd.f32 %v33, 0.0
    %v56 = vadd.f32 %v36, 0.0
    %v57 = vadd.f32 %v39, 0.0
    %v58 = vadd.f32 %v42, 0.0
    %v59 = vadd.f32 %v45, 0.0
    %v60 = vadd.f32 %v48, 0.0
    %v61 = vadd.f32 %v51, 0.0
    %v62 = vadd.f32 %v54, 0.0
    %v63 = vmul.f32 %v55, 0.00390625
    %v64 = vmul.f32 %v56, 0.00390625
    %v65 = vmul.f32 %v57, 0.00390625
    %v66 = vmul.f32 %v58, 0.00390625
    %v67 = vmul.f32 %v59, 0.00390625
    %v68 = vmul.f32 %v60, 0.00390625
    %v69 = vmul.f32 %v61, 0.00390625
    %v70 = vmul.f32 %v62, 0.00390625
    %v71 = vld [vmem:[%s1] sm:$0xff]
    %v72 = vld [vmem:[%s1 + $0x8] sm:$0xff]
    %v73 = vld [vmem:[%s1 + $0x10] sm:$0xff]
    %v74 = vld [vmem:[%s1 + $0x18] sm:$0xff]
    %v83 = vlaneseq
    %v84 = vand.u32 %v83, 127
    %v85 = vlaneseq
    %v86 = vshrl.u32 %v85, 7
    %v87 = vsub.s32 %v84, %v86
    %v88 = vrot.slane %v63, %v87
    %v89 = vadd.s32 %v84, 4294967288
    %v90 = vlaneseq
    %v91 = vshrl.u32 %v90, 7
    %v92 = vsub.s32 %v89, %v91
    %v93 = vrot.slane %v64, %v92
    %vm94 = vcmask 130112
    %v95 = vsel %vm94, %v93, %v88
    %v96 = vadd.s32 %v84, 4294967280
    %v97 = vlaneseq
    %v98 = vshrl.u32 %v97, 7
    %v99 = vsub.s32 %v96, %v98
    %v100 = vrot.slane %v65, %v99
    %vm101 = vcmask 195712
    %v102 = vsel %vm101, %v100, %v95
    %v103 = vadd.s32 %v84, 4294967272
    %v104 = vlaneseq
    %v105 = vshrl.u32 %v104, 7
    %v106 = vsub.s32 %v103, %v105
    %v107 = vrot.slane %v66, %v106
    %vm108 = vcmask 261312
    %v109 = vsel %vm108, %v107, %v102
    %v110 = vlaneseq
    %v111 = vshrl.u32 %v110, 7
    %v112 = vsub.s32 %v84, %v111
    %v113 = vrot.slane %v67, %v112
    %v114 = vlaneseq
    %v115 = vshrl.u32 %v114, 7
    %v116 = vsub.s32 %v89, %v115
    %v117 = vrot.slane %v68, %v116
    %v118 = vsel %vm94, %v117, %v113
    %v119 = vlaneseq
    %v120 = vshrl.u32 %v119, 7
    %v121 = vsub.s32 %v96, %v120
    %v122 = vrot.slane %v69, %v121
    %v123 = vsel %vm101, %v122, %v118
    %v124 = vlaneseq
    %v125 = vshrl.u32 %v124, 7
    %v126 = vsub.s32 %v103, %v125
    %v127 = vrot.slane %v70, %v126
    %v128 = vsel %vm108, %v127, %v123
    %vm129 = vcmask 1041409
    %v130 = vsel %vm129, %v128, %v109
    %vm131 = vcmask 261120
    %v132 = vsel %vm131, %v130, 0
    %134 = vmatprep.subr.mxu0 0.0
    %135 = vmatpush1.msra.mxu0 %v71
    %136 = vmatprep.subr.mxu0 0.0
    %137 = vmatpush1.msra.mxu0 %v72
    %138 = vmatprep.subr.mxu0 0.0
    %139 = vmatpush1.msra.mxu0 %v73
    %140 = vmatprep.subr.mxu0 0.0
    %141 = vmatpush1.msra.mxu0 %v74
    %142 = vmatprep.subr.mxu0 0.0
    %143 = vmatpush1.msra.mxu0 0.0
    %144 = vmatprep.subr.mxu0 0.0
    %145 = vmatpush1.msra.mxu0 0.0
    %146 = vmatprep.subr.mxu0 0.0
    %147 = vmatpush1.msra.mxu0 0.0
    %148 = vmatprep.subr.mxu0 0.0
    %149 = vmatpush1.msra.mxu0 0.0
    %150 = vmatprep.subr.mxu0 0.0
    %151 = vmatpush1.msra.mxu0 0.0
    %152 = vmatprep.subr.mxu0 0.0
    %153 = vmatpush1.msra.mxu0 0.0
    %154 = vmatprep.subr.mxu0 0.0
    %155 = vmatpush1.msra.mxu0 0.0
    %156 = vmatprep.subr.mxu0 0.0
    %157 = vmatpush1.msra.mxu0 0.0
    %158 = vmatprep.subr.mxu0 0.0
    %159 = vmatpush1.msra.mxu0 0.0
    %160 = vmatprep.subr.mxu0 0.0
    %161 = vmatpush1.msra.mxu0 0.0
    %162 = vmatprep.subr.mxu0 0.0
    %163 = vmatpush1.msra.mxu0 0.0
    %164 = vmatprep.subr.mxu0 0.0
    %165 = vmatpush1.msra.mxu0 0.0
    %166 = vmatprep.subr.mxu0 0.0
    %167 = vmatpush1.msra.mxu0 0.0
    %168 = vmatprep.subr.mxu0 0.0
    %169 = vmatpush1.msra.mxu0 0.0
    %170 = vmatprep.subr.mxu0 0.0
    %171 = vmatpush1.msra.mxu0 0.0
    %172 = vmatprep.subr.mxu0 0.0
    %173 = vmatpush1.msra.mxu0 0.0
    %174 = vmatprep.subr.mxu0 0.0
    %175 = vmatpush1.msra.mxu0 0.0
    %176 = vmatprep.subr.mxu0 0.0
    %177 = vmatpush1.msra.mxu0 0.0
    %178 = vmatprep.subr.mxu0 0.0
    %179 = vmatpush1.msra.mxu0 0.0
    %180 = vmatprep.subr.mxu0 0.0
    %181 = vmatpush1.msra.mxu0 0.0
    %182 = vmatprep.subr.mxu0 0.0
    %183 = vmatpush1.msra.mxu0 0.0
    %184 = vmatprep.subr.mxu0 0.0
    %185 = vmatpush1.msra.mxu0 0.0
    %186 = vmatprep.subr.mxu0 0.0
    %187 = vmatpush1.msra.mxu0 0.0
    %188 = vmatprep.subr.mxu0 0.0
    %189 = vmatpush1.msra.mxu0 0.0
    %190 = vmatprep.subr.mxu0 0.0
    %191 = vmatpush1.msra.mxu0 0.0
    %192 = vmatprep.subr.mxu0 0.0
    %193 = vmatpush1.msra.mxu0 0.0
    %194 = vmatprep.subr.mxu0 0.0
    %195 = vmatpush1.msra.mxu0 0.0
    %196 = vmatprep.subr.mxu0 0.0
    %197 = vmatpush1.msra.mxu0 0.0
    %198 = vmatprep.mubr.f32.mxu0 0.0
    %199 = vmatmul.mubr.f32.gmra.mrb[0].mxu0 %v132
    %v200 = vpop.f32.mrb[0].mxu0
    %v201 = vadd.f32 0.0, %v200
    %v202 = vpop.f32.mrb[0].mxu0
    %203 = vdwg.mxu0
    %v204 = vmax.f32 %v201, 0.0
    %v205 = vld [vmem:[%s2] sm:$0xff]
    %v206 = vld [vmem:[%s2 + $0x8] sm:$0xff]
    %v207 = vld [vmem:[%s2 + $0x10] sm:$0xff]
    %v208 = vld [vmem:[%s2 + $0x18] sm:$0xff]
    %v209 = vld [vmem:[%s2 + $0x20] sm:$0xff]
    %v210 = vld [vmem:[%s2 + $0x28] sm:$0xff]
    %v211 = vld [vmem:[%s2 + $0x30] sm:$0xff]
    %v212 = vld [vmem:[%s2 + $0x38] sm:$0xff]
    %v213 = vld [vmem:[%s2 + $0x40] sm:$0xff]
    %v214 = vld [vmem:[%s2 + $0x48] sm:$0xff]
    %v215 = vld [vmem:[%s2 + $0x50] sm:$0xff]
    %v216 = vld [vmem:[%s2 + $0x58] sm:$0xff]
    %v217 = vld [vmem:[%s2 + $0x60] sm:$0xff]
    %v218 = vld [vmem:[%s2 + $0x68] sm:$0xff]
    %v219 = vld [vmem:[%s2 + $0x70] sm:$0xff]
    %v220 = vld [vmem:[%s2 + $0x78] sm:$0xff]
    %221 = vmatprep.subr.mxu0 0.0
    %222 = vmatpush1.msra.mxu0 %v205
    %223 = vmatprep.subr.mxu0 0.0
    %224 = vmatpush1.msra.mxu0 %v206
    %225 = vmatprep.subr.mxu0 0.0
    %226 = vmatpush1.msra.mxu0 %v207
    %227 = vmatprep.subr.mxu0 0.0
    %228 = vmatpush1.msra.mxu0 %v208
    %229 = vmatprep.subr.mxu0 0.0
    %230 = vmatpush1.msra.mxu0 %v209
    %231 = vmatprep.subr.mxu0 0.0
    %232 = vmatpush1.msra.mxu0 %v210
    %233 = vmatprep.subr.mxu0 0.0
    %234 = vmatpush1.msra.mxu0 %v211
    %235 = vmatprep.subr.mxu0 0.0
    %236 = vmatpush1.msra.mxu0 %v212
    %237 = vmatprep.subr.mxu0 0.0
    %238 = vmatpush1.msra.mxu0 %v213
    %239 = vmatprep.subr.mxu0 0.0
    %240 = vmatpush1.msra.mxu0 %v214
    %241 = vmatprep.subr.mxu0 0.0
    %242 = vmatpush1.msra.mxu0 %v215
    %243 = vmatprep.subr.mxu0 0.0
    %244 = vmatpush1.msra.mxu0 %v216
    %245 = vmatprep.subr.mxu0 0.0
    %246 = vmatpush1.msra.mxu0 %v217
    %247 = vmatprep.subr.mxu0 0.0
    %248 = vmatpush1.msra.mxu0 %v218
    %249 = vmatprep.subr.mxu0 0.0
    %250 = vmatpush1.msra.mxu0 %v219
    %251 = vmatprep.subr.mxu0 0.0
    %252 = vmatpush1.msra.mxu0 %v220
    %253 = vmatprep.subr.mxu0 0.0
    %254 = vmatpush1.msra.mxu0 0.0
    %255 = vmatprep.subr.mxu0 0.0
    %256 = vmatpush1.msra.mxu0 0.0
    %257 = vmatprep.subr.mxu0 0.0
    %258 = vmatpush1.msra.mxu0 0.0
    %259 = vmatprep.subr.mxu0 0.0
    %260 = vmatpush1.msra.mxu0 0.0
    %261 = vmatprep.subr.mxu0 0.0
    %262 = vmatpush1.msra.mxu0 0.0
    %263 = vmatprep.subr.mxu0 0.0
    %264 = vmatpush1.msra.mxu0 0.0
    %265 = vmatprep.subr.mxu0 0.0
    %266 = vmatpush1.msra.mxu0 0.0
    %267 = vmatprep.subr.mxu0 0.0
    %268 = vmatpush1.msra.mxu0 0.0
    %269 = vmatprep.subr.mxu0 0.0
    %270 = vmatpush1.msra.mxu0 0.0
    %271 = vmatprep.subr.mxu0 0.0
    %272 = vmatpush1.msra.mxu0 0.0
    %273 = vmatprep.subr.mxu0 0.0
    %274 = vmatpush1.msra.mxu0 0.0
    %275 = vmatprep.subr.mxu0 0.0
    %276 = vmatpush1.msra.mxu0 0.0
    %277 = vmatprep.subr.mxu0 0.0
    %278 = vmatpush1.msra.mxu0 0.0
    %279 = vmatprep.subr.mxu0 0.0
    %280 = vmatpush1.msra.mxu0 0.0
    %281 = vmatprep.subr.mxu0 0.0
    %282 = vmatpush1.msra.mxu0 0.0
    %283 = vmatprep.subr.mxu0 0.0
    %284 = vmatpush1.msra.mxu0 0.0
    %285 = vmatprep.mubr.f32.mxu0 0.0
    %286 = vmatmul.mubr.f32.gmra.mrb[0].mxu0 %v204
    %v287 = vpop.f32.mrb[0].mxu0
    %v288 = vadd.f32 0.0, %v287
    %v289 = vpop.f32.mrb[0].mxu0
    %290 = vdwg.mxu0
    %v291 = vsub.f32 0.0, %v288
    %v292 = vmul.f32 %v291, 1.442695
    %v293 = vpow.pop %v292
    %v294 = vadd.f32 %v293, 1.0
    %v295 = vrcp.pop %v294
    %v296 = vmul.f32 1.0, %v295
    %v297 = vlaneseq
    %v298 = vshrl.u32 %v297, 7
    %v299 = vsub.s32 0, %v298
    %v300 = vrot.slane %v296, %v299
    %302 = vbcast.lane.b32.xlu0 %v300, 256
    %v303 = vpop.permute.xlu0 %302
    %s305 = sor.u32 256, 8
    %306 = vbcast.lane.b32.xlu0 %v300, %s305
    %v307 = vpop.permute.xlu0 %306
    %s309 = sor.u32 256, 16
    %310 = vbcast.lane.b32.xlu0 %v300, %s309
    %v311 = vpop.permute.xlu0 %310
    %s313 = sor.u32 256, 24
    %314 = vbcast.lane.b32.xlu0 %v300, %s313
    %v315 = vpop.permute.xlu0 %314
    %v316 = vlaneseq
    %v317 = vshrl.u32 %v316, 7
    %v318 = vsub.s32 1, %v317
    %v319 = vrot.slane %v296, %v318
    %321 = vbcast.lane.b32.xlu0 %v319, 256
    %v322 = vpop.permute.xlu0 %321
    %s324 = sor.u32 256, 8
    %325 = vbcast.lane.b32.xlu0 %v319, %s324
    %v326 = vpop.permute.xlu0 %325
    %s328 = sor.u32 256, 16
    %329 = vbcast.lane.b32.xlu0 %v319, %s328
    %v330 = vpop.permute.xlu0 %329
    %s332 = sor.u32 256, 24
    %333 = vbcast.lane.b32.xlu0 %v319, %s332
    %v334 = vpop.permute.xlu0 %333
    %v335 = vmul.f32 %v15, %v303
    %v336 = vmul.f32 %v16, %v303
    %v337 = vmul.f32 %v17, %v307
    %v338 = vmul.f32 %v18, %v307
    %v339 = vmul.f32 %v19, %v311
    %v340 = vmul.f32 %v20, %v311
    %v341 = vmul.f32 %v21, %v315
    %v342 = vmul.f32 %v22, %v315
    %v343 = vmul.f32 %v23, %v322
    %v344 = vmul.f32 %v24, %v322
    %v345 = vmul.f32 %v25, %v326
    %v346 = vmul.f32 %v26, %v326
    %v347 = vmul.f32 %v27, %v330
    %v348 = vmul.f32 %v28, %v330
    %v349 = vmul.f32 %v29, %v334
    %v350 = vmul.f32 %v30, %v334
    %351 = vst [vmem:[#allocation2] sm:$0xff] %v335
    %352 = vst [vmem:[#allocation2 + $0x8] sm:$0xff] %v336
    %353 = vst [vmem:[#allocation2 + $0x10] sm:$0xff] %v337
    %354 = vst [vmem:[#allocation2 + $0x18] sm:$0xff] %v338
    %355 = vst [vmem:[#allocation2 + $0x20] sm:$0xff] %v339
    %356 = vst [vmem:[#allocation2 + $0x28] sm:$0xff] %v340
    %357 = vst [vmem:[#allocation2 + $0x30] sm:$0xff] %v341
    %358 = vst [vmem:[#allocation2 + $0x38] sm:$0xff] %v342
    %359 = vst [vmem:[#allocation2 + $0x40] sm:$0xff] %v343
    %360 = vst [vmem:[#allocation2 + $0x48] sm:$0xff] %v344
    %361 = vst [vmem:[#allocation2 + $0x50] sm:$0xff] %v345
    %362 = vst [vmem:[#allocation2 + $0x58] sm:$0xff] %v346
    %363 = vst [vmem:[#allocation2 + $0x60] sm:$0xff] %v347
    %364 = vst [vmem:[#allocation2 + $0x68] sm:$0xff] %v348
    %365 = vst [vmem:[#allocation2 + $0x70] sm:$0xff] %v349
    %366 = vst [vmem:[#allocation2 + $0x78] sm:$0xff] %v350
    // Predicated region
    $region14: #{tpu_custom_call.1} parent=1 // pred_check
      _
    $region15: #{tpu_custom_call.1} parent=1 // pred_check_branch
      %368 = sbr.rel (0) target = $region17
    $region16: #{tpu_custom_call.1} parent=1 // pred_region
      %s370 = ssub.s32 2048, 2048
      %371 = vsyncadd [#allocation3], %s370
      %s372 = sshll.u32 [#allocation2], 4
      %s373 = int_to_ptr.vmem [resolvable:$true] %s372
      %378 = dma.vmem_to_hbm [thread:$0]  %s373, 2048, %s3, [#allocation3], 256, 256, 16
    $region17: #{tpu_custom_call.1} parent=1 // pred_fallthru
      _
    // Predicated region
    $region18: #{tpu_custom_call.1} parent=1 // pred_check
      _
    $region19: #{tpu_custom_call.1} parent=1 // pred_check_branch
      %380 = sbr.rel (0) target = $region21
    $region20: #{tpu_custom_call.1} parent=1 // pred_region
      %381 = dma.done [#allocation3], 2048
    $region21: #{tpu_custom_call.1} parent=1 // pred_fallthru
      _
    %382 = vsyncpa [#allocation3], 1

</llo_original>
